<compile_context>
chip_gen: v7x
topology: tpu7x:2x2x1
jax: 0.10.0
libtpu: 0.0.40
codegen_flags: <defaults>
</compile_context>

<pallas_src>
import functools

import jax
import jax.numpy as jnp
from jax.experimental import pallas as pl
from jax.experimental.pallas import tpu as pltpu

DROPOUT = 0.2
_KEEP_SCALE = 1.0 / (1.0 - DROPOUT)


def _round_up(x, m):
    return (x + m - 1) // m * m


def _pad2d(a, rows, cols):
    pr, pc = rows - a.shape[0], cols - a.shape[1]
    if pr == 0 and pc == 0:
        return a
    return jnp.pad(a, ((0, pr), (0, pc)))


def ffn_kernel(*refs, training):
    if training:
        x_ref, w1_ref, b1_ref, w2_ref, b2_ref, mask_ref, o_ref = refs
    else:
        x_ref, w1_ref, b1_ref, w2_ref, b2_ref, o_ref = refs
        mask_ref = None
    # Linear 1 (bf16 MXU, f32 accumulate) + bias + ReLU.
    xt = x_ref[...].astype(w1_ref.dtype)  # no-op when x was pre-cast to bf16
    h = jnp.dot(xt, w1_ref[...], preferred_element_type=jnp.float32)
    h = jnp.maximum(h + b1_ref[...], 0.0)
    # Linear 2: deliberate f32 -> bf16 downcast of the activation for the MXU.
    y = jnp.dot(h.astype(w2_ref.dtype), w2_ref[...],
                preferred_element_type=jnp.float32)
    y = y + b2_ref[...]
    if training:
        # Inverted dropout: mask holds 0 or 1/(1-p); generated in the wrapper.
        y = y * mask_ref[...].astype(jnp.float32)
    o_ref[...] = y.astype(o_ref.dtype)


def _vmem_cap_bytes():
    """Generation-aware VMEM budget (~3/4 of physical), with a safe fallback."""
    try:
        return int(pltpu.get_tpu_info().vmem_capacity_bytes) * 3 // 4
    except Exception:
        return 48 * 1024 * 1024


def feed_forward(x, w1, b1, w2, b2, *, seed=0, training=False, tm=512,
                 kernel_out_dtype=jnp.bfloat16):
    """x: (B, T, in_size); w1: (in_size, 4*out); b1: (1, 4*out);
    w2: (4*out, out); b2: (1, out). Returns (B, T, out) in x.dtype."""
    B, T, C = x.shape
    H = w1.shape[1]
    O = w2.shape[1]
    M = B * T

    # Lane-dense padded channel dims (zero padding preserves linear semantics).
    Cp = _round_up(C, 128)
    Hp = _round_up(H, 128)
    Op = _round_up(O, 128)

    # Row tile: multiple of 16 (bf16 sublane packing), as big as allowed.
    tm = max(16, (tm // 16) * 16)
    TM = min(tm, _round_up(M, 16))
    if M <= TM and M >= 32:
        # Split into (at least) two row tiles so both v7x TensorCores get work.
        TM = _round_up((M + 1) // 2, 16)
    Mp = _round_up(M, TM)
    grid = (Mp // TM,)

    # Stream x without an extra padded HBM copy whenever possible; otherwise
    # pad+cast once (bf16, so the copy is 2 B/elem).
    x2d = x.reshape(M, C)
    if (Cp != C) or (Mp != M):
        x2 = _pad2d(x2d.astype(jnp.bfloat16), Mp, Cp)
    else:
        x2 = x2d  # original dtype; cast to bf16 on the VMEM tile in-kernel

    # bf16 weights for the MXU; f32 biases (added to the f32 accumulator).
    w1p = _pad2d(w1, Cp, Hp).astype(jnp.bfloat16)
    b1p = _pad2d(b1, 1, Hp).astype(jnp.float32)
    w2p = _pad2d(w2, Hp, Op).astype(jnp.bfloat16)
    b2p = _pad2d(b2, 1, Op).astype(jnp.float32)

    mask = None
    if training:
        # nn.Dropout(0.2): inverted dropout.  Counter-based jax.random (not the
        # stateful TPU PRNG) -> portable and no correlated per-tile streams.
        keep = jax.random.bernoulli(jax.random.PRNGKey(seed), 1.0 - DROPOUT,
                                    (Mp, Op))
        mask = jnp.where(keep, _KEEP_SCALE, 0.0).astype(jnp.bfloat16)

    xbytes = jnp.dtype(x2.dtype).itemsize
    obytes = jnp.dtype(kernel_out_dtype).itemsize

    # VMEM footprint estimate (double-buffered streams + resident weights +
    # f32 intermediates) with 2x headroom, clamped to the per-generation cap.
    vmem_est = (
        2 * TM * Cp * xbytes                 # x tile, double buffer
        + 2 * TM * Op * obytes               # out tile, double buffer
        + 2 * (Cp * Hp + Hp * Op) * 2        # weights (conservative: 2 copies)
        + 2 * (Hp + Op) * 4                  # biases
        + TM * Hp * 4 + TM * Op * 4          # f32 intermediates
        + (2 * TM * Op * 2 if training else 0)  # bf16 dropout-mask tile
    )
    vmem_limit = min(max(2 * vmem_est, 16 * 1024 * 1024), _vmem_cap_bytes())

    bytes_accessed = (x2.size * xbytes + w1p.size * 2 + w2p.size * 2
                      + b1p.size * 4 + b2p.size * 4 + Mp * Op * obytes
                      + (Mp * Op * 2 if training else 0))
    cost = pl.CostEstimate(
        flops=2 * Mp * Cp * Hp + 2 * Mp * Hp * Op,
        transcendentals=0,
        bytes_accessed=bytes_accessed,
    )

    def run(weight_pm):
        res_kw = {} if weight_pm is None else {"pipeline_mode": weight_pm}
        in_specs = [
            pl.BlockSpec((TM, Cp), lambda i: (i, 0)),             # x: streamed
            pl.BlockSpec((Cp, Hp), lambda i: (0, 0), **res_kw),   # w1: resident
            pl.BlockSpec((1, Hp), lambda i: (0, 0), **res_kw),    # b1: resident
            pl.BlockSpec((Hp, Op), lambda i: (0, 0), **res_kw),   # w2: resident
            pl.BlockSpec((1, Op), lambda i: (0, 0), **res_kw),    # b2: resident
        ]
        args = [x2, w1p, b1p, w2p, b2p]
        if training:
            in_specs.append(pl.BlockSpec((TM, Op), lambda i: (i, 0)))  # mask
            args.append(mask)
        return pl.pallas_call(
            functools.partial(ffn_kernel, training=training),
            out_shape=jax.ShapeDtypeStruct((Mp, Op), kernel_out_dtype),
            grid=grid,
            in_specs=in_specs,
            out_specs=pl.BlockSpec((TM, Op), lambda i: (i, 0)),
            compiler_params=pltpu.CompilerParams(
                dimension_semantics=("parallel",),  # row tiles across TCs (v7x)
                vmem_limit_bytes=vmem_limit,
            ),
            cost_estimate=cost,
        )(*args)

    try:
        # Resident weights never change across the grid -> single-buffer them.
        out = run(pl.Buffered(1))
    except Exception:
        out = run(None)  # fallback if this JAX version rejects Buffered(1)

    # TODO(synk): add an Hp-tiled weight-streaming path (f32 accumulator +
    # pl.when init/finalize) for v7x once 2*Hp*(Cp+Op) bf16 bytes no longer fit
    # comfortably in the 64 MiB per-TC VMEM.
    return out[:M, :O].reshape(B, T, O).astype(x.dtype)


def init_params(key, in_size, out_size, dtype=jnp.float32):
    """Deterministic init mimicking torch.nn.Linear default U(-1/sqrt(fan_in), +)."""
    hidden = out_size * 4
    k1, k2, k3, k4 = jax.random.split(key, 4)
    bound1 = 1.0 / (in_size ** 0.5)
    bound2 = 1.0 / (hidden ** 0.5)
    w1 = jax.random.uniform(k1, (in_size, hidden), dtype, -bound1, bound1)
    b1 = jax.random.uniform(k2, (1, hidden), dtype, -bound1, bound1)
    w2 = jax.random.uniform(k3, (hidden, out_size), dtype, -bound2, bound2)
    b2 = jax.random.uniform(k4, (1, out_size), dtype, -bound2, bound2)
    return w1, b1, w2, b2


if __name__ == "__main__":
    # Small shapes consistent with the module's use in bigram.py: (B, T, n_embd)
    B, T, IN_SIZE, OUT_SIZE = 2, 8, 32, 32

    key = jax.random.PRNGKey(0)
    kx, kp = jax.random.split(key)
    x = jax.random.normal(kx, (B, T, IN_SIZE), dtype=jnp.float32)
    w1, b1, w2, b2 = init_params(kp, IN_SIZE, OUT_SIZE)

    # Eval-mode forward (Dropout is identity in eval mode).
    y = feed_forward(x, w1, b1, w2, b2, training=False)
    y = jax.block_until_ready(y)

    # Pure-JAX f32 reference; kernel runs bf16 matmuls with f32 accumulation
    # and a bf16 store, so compare with a bf16-level tolerance.
    ref = jnp.maximum(x.reshape(-1, IN_SIZE) @ w1 + b1, 0.0) @ w2 + b2
    ref = ref.reshape(B, T, OUT_SIZE)
    assert y.shape == (B, T, OUT_SIZE)
    assert y.dtype == x.dtype
    assert jnp.allclose(y, ref, atol=5e-2, rtol=5e-2), "mismatch vs reference"

    # Training (dropout) path: keep-rate ~0.8 and kept entries scaled by 1/(1-p).
    y_train = feed_forward(x, w1, b1, w2, b2, seed=123, training=True)
    y_train = jax.block_until_ready(y_train)
    assert y_train.shape == (B, T, OUT_SIZE)
    kept = float(jnp.mean((y_train != 0).astype(jnp.float32)))
    assert 0.6 <= kept <= 0.95, f"dropout keep-rate {kept} far from 0.8"
    nz = y_train != 0
    assert jnp.allclose(jnp.where(nz, y_train, 0.0),
                        jnp.where(nz, ref * _KEEP_SCALE, 0.0),
                        atol=5e-2, rtol=5e-2), "dropout scaling mismatch"

    print("KERNEL_OK")
</pallas_src>

<mosaic_0001>
module attributes {stable_mosaic.version = 11 : i64} {
  func.func @ffn_kernel(%arg0: i32, %arg1: memref<16x128xbf16, #tpu.memory_space<vmem>>, %arg2: memref<128x128xbf16, #tpu.memory_space<vmem>>, %arg3: memref<1x128xf32, #tpu.memory_space<vmem>>, %arg4: memref<128x128xbf16, #tpu.memory_space<vmem>>, %arg5: memref<1x128xf32, #tpu.memory_space<vmem>>, %arg6: memref<16x128xbf16, #tpu.memory_space<vmem>>) attributes {dimension_semantics = [#tpu.dimension_semantics<parallel>], iteration_bounds = array<i64: 1>, scalar_prefetch = 0 : i64, scratch_operands = 0 : i64, tpu.core_type = #tpu.core_type<tc>, window_params = [{transform_indices = @transform_0, window_bounds = array<i64: 16, 128>}, {pipeline_mode = #tpu.pipeline_mode<synchronous>, transform_indices = @transform_1, window_bounds = array<i64: 128, 128>}, {pipeline_mode = #tpu.pipeline_mode<synchronous>, transform_indices = @transform_2, window_bounds = array<i64: 1, 128>}, {pipeline_mode = #tpu.pipeline_mode<synchronous>, transform_indices = @transform_3, window_bounds = array<i64: 128, 128>}, {pipeline_mode = #tpu.pipeline_mode<synchronous>, transform_indices = @transform_4, window_bounds = array<i64: 1, 128>}, {transform_indices = @transform_5, window_bounds = array<i64: 16, 128>}]} {
    %c0 = arith.constant 0 : index
    %c0_0 = arith.constant 0 : index
    %0 = vector.load %arg1[%c0, %c0_0] : memref<16x128xbf16, #tpu.memory_space<vmem>>, vector<16x128xbf16>
    %c0_1 = arith.constant 0 : index
    %c0_2 = arith.constant 0 : index
    %1 = vector.load %arg2[%c0_1, %c0_2] : memref<128x128xbf16, #tpu.memory_space<vmem>>, vector<128x128xbf16>
    %cst = arith.constant dense<0.000000e+00> : vector<16x128xf32>
    %2 = tpu.matmul %0, %1, %cst {dimension_numbers = #tpu.dot_dimension_numbers<[1], [0], [0], [1], [0, 0, 1, 1], [], []>} : vector<16x128xbf16>, vector<128x128xbf16>, vector<16x128xf32> -> vector<16x128xf32>
    %c0_3 = arith.constant 0 : index
    %c0_4 = arith.constant 0 : index
    %3 = vector.load %arg3[%c0_3, %c0_4] : memref<1x128xf32, #tpu.memory_space<vmem>>, vector<1x128xf32>
    %4 = vector.broadcast %3 : vector<1x128xf32> to vector<16x128xf32>
    %5 = arith.addf %2, %4 : vector<16x128xf32>
    %cst_5 = arith.constant 0.000000e+00 : f32
    %6 = vector.broadcast %cst_5 : f32 to vector<16x128xf32>
    %7 = arith.maximumf %5, %6 : vector<16x128xf32>
    %8 = arith.truncf %7 : vector<16x128xf32> to vector<16x128xbf16>
    %c0_6 = arith.constant 0 : index
    %c0_7 = arith.constant 0 : index
    %9 = vector.load %arg4[%c0_6, %c0_7] : memref<128x128xbf16, #tpu.memory_space<vmem>>, vector<128x128xbf16>
    %cst_8 = arith.constant dense<0.000000e+00> : vector<16x128xf32>
    %10 = tpu.matmul %8, %9, %cst_8 {dimension_numbers = #tpu.dot_dimension_numbers<[1], [0], [0], [1], [0, 0, 1, 1], [], []>} : vector<16x128xbf16>, vector<128x128xbf16>, vector<16x128xf32> -> vector<16x128xf32>
    %c0_9 = arith.constant 0 : index
    %c0_10 = arith.constant 0 : index
    %11 = vector.load %arg5[%c0_9, %c0_10] : memref<1x128xf32, #tpu.memory_space<vmem>>, vector<1x128xf32>
    %12 = vector.broadcast %11 : vector<1x128xf32> to vector<16x128xf32>
    %13 = arith.addf %10, %12 : vector<16x128xf32>
    %14 = arith.truncf %13 : vector<16x128xf32> to vector<16x128xbf16>
    %c0_11 = arith.constant 0 : index
    %c0_12 = arith.constant 0 : index
    %15 = vector.load %arg6[%c0_11, %c0_12] : memref<16x128xbf16, #tpu.memory_space<vmem>>, vector<16x128xbf16>
    tpu.vector_store %arg6[%c0_11, %c0_12], %14 {strides = array<i32>} : memref<16x128xbf16, #tpu.memory_space<vmem>>, vector<16x128xbf16>,
    return
  }
  func.func @transform_0(%arg0: i32) -> (i32, i32) {
    %c0_i32 = arith.constant 0 : i32
    %c0_i32_0 = arith.constant 0 : i32
    return %arg0, %c0_i32 : i32, i32
  }
  func.func @transform_1(%arg0: i32) -> (i32, i32) {
    %c0_i32 = arith.constant 0 : i32
    %c0_i32_0 = arith.constant 0 : i32
    %c0_i32_1 = arith.constant 0 : i32
    return %c0_i32, %c0_i32_0 : i32, i32
  }
  func.func @transform_2(%arg0: i32) -> (i32, i32) {
    %c0_i32 = arith.constant 0 : i32
    %c0_i32_0 = arith.constant 0 : i32
    %c0_i32_1 = arith.constant 0 : i32
    return %c0_i32, %c0_i32_0 : i32, i32
  }
  func.func @transform_3(%arg0: i32) -> (i32, i32) {
    %c0_i32 = arith.constant 0 : i32
    %c0_i32_0 = arith.constant 0 : i32
    %c0_i32_1 = arith.constant 0 : i32
    return %c0_i32, %c0_i32_0 : i32, i32
  }
  func.func @transform_4(%arg0: i32) -> (i32, i32) {
    %c0_i32 = arith.constant 0 : i32
    %c0_i32_0 = arith.constant 0 : i32
    %c0_i32_1 = arith.constant 0 : i32
    return %c0_i32, %c0_i32_0 : i32, i32
  }
  func.func @transform_5(%arg0: i32) -> (i32, i32) {
    %c0_i32 = arith.constant 0 : i32
    %c0_i32_0 = arith.constant 0 : i32
    return %arg0, %c0_i32 : i32, i32
  }
}

module attributes {stable_mosaic.version = 11 : i64} {
  func.func @ffn_kernel(%arg0: i32, %arg1: memref<16x128xbf16, #tpu.memory_space<vmem>>, %arg2: memref<128x128xbf16, #tpu.memory_space<vmem>>, %arg3: memref<1x128xf32, #tpu.memory_space<vmem>>, %arg4: memref<128x128xbf16, #tpu.memory_space<vmem>>, %arg5: memref<1x128xf32, #tpu.memory_space<vmem>>, %arg6: memref<16x128xbf16, #tpu.memory_space<vmem>>) attributes {dimension_semantics = [#tpu.dimension_semantics<parallel>], iteration_bounds = array<i64: 1>, scalar_prefetch = 0 : i64, scratch_operands = 0 : i64, tpu.core_type = #tpu.core_type<tc>, window_params = [{transform_indices = @transform_0, window_bounds = array<i64: 16, 128>}, {pipeline_mode = #tpu.pipeline_mode<synchronous>, transform_indices = @transform_1, window_bounds = array<i64: 128, 128>}, {pipeline_mode = #tpu.pipeline_mode<synchronous>, transform_indices = @transform_2, window_bounds = array<i64: 1, 128>}, {pipeline_mode = #tpu.pipeline_mode<synchronous>, transform_indices = @transform_3, window_bounds = array<i64: 128, 128>}, {pipeline_mode = #tpu.pipeline_mode<synchronous>, transform_indices = @transform_4, window_bounds = array<i64: 1, 128>}, {transform_indices = @transform_5, window_bounds = array<i64: 16, 128>}]} {
    %c0 = arith.constant 0 : index
    %c0_0 = arith.constant 0 : index
    %0 = vector.load %arg1[%c0, %c0_0] : memref<16x128xbf16, #tpu.memory_space<vmem>>, vector<16x128xbf16>
    %c0_1 = arith.constant 0 : index
    %c0_2 = arith.constant 0 : index
    %1 = vector.load %arg2[%c0_1, %c0_2] : memref<128x128xbf16, #tpu.memory_space<vmem>>, vector<128x128xbf16>
    %cst = arith.constant dense<0.000000e+00> : vector<16x128xf32>
    %2 = tpu.matmul %0, %1, %cst {dimension_numbers = #tpu.dot_dimension_numbers<[1], [0], [0], [1], [0, 0, 1, 1], [], []>} : vector<16x128xbf16>, vector<128x128xbf16>, vector<16x128xf32> -> vector<16x128xf32>
    %c0_3 = arith.constant 0 : index
    %c0_4 = arith.constant 0 : index
    %3 = vector.load %arg3[%c0_3, %c0_4] : memref<1x128xf32, #tpu.memory_space<vmem>>, vector<1x128xf32>
    %4 = vector.broadcast %3 : vector<1x128xf32> to vector<16x128xf32>
    %5 = arith.addf %2, %4 : vector<16x128xf32>
    %cst_5 = arith.constant 0.000000e+00 : f32
    %6 = vector.broadcast %cst_5 : f32 to vector<16x128xf32>
    %7 = arith.maximumf %5, %6 : vector<16x128xf32>
    %8 = arith.truncf %7 : vector<16x128xf32> to vector<16x128xbf16>
    %c0_6 = arith.constant 0 : index
    %c0_7 = arith.constant 0 : index
    %9 = vector.load %arg4[%c0_6, %c0_7] : memref<128x128xbf16, #tpu.memory_space<vmem>>, vector<128x128xbf16>
    %cst_8 = arith.constant dense<0.000000e+00> : vector<16x128xf32>
    %10 = tpu.matmul %8, %9, %cst_8 {dimension_numbers = #tpu.dot_dimension_numbers<[1], [0], [0], [1], [0, 0, 1, 1], [], []>} : vector<16x128xbf16>, vector<128x128xbf16>, vector<16x128xf32> -> vector<16x128xf32>
    %c0_9 = arith.constant 0 : index
    %c0_10 = arith.constant 0 : index
    %11 = vector.load %arg5[%c0_9, %c0_10] : memref<1x128xf32, #tpu.memory_space<vmem>>, vector<1x128xf32>
    %12 = vector.broadcast %11 : vector<1x128xf32> to vector<16x128xf32>
    %13 = arith.addf %10, %12 : vector<16x128xf32>
    %14 = arith.truncf %13 : vector<16x128xf32> to vector<16x128xbf16>
    %c0_11 = arith.constant 0 : index
    %c0_12 = arith.constant 0 : index
    %15 = vector.load %arg6[%c0_11, %c0_12] : memref<16x128xbf16, #tpu.memory_space<vmem>>, vector<16x128xbf16>
    tpu.vector_store %arg6[%c0_11, %c0_12], %14 {strides = array<i32>} : memref<16x128xbf16, #tpu.memory_space<vmem>>, vector<16x128xbf16>,
    return
  }
  func.func @transform_0(%arg0: i32) -> (i32, i32) {
    %c0_i32 = arith.constant 0 : i32
    %c0_i32_0 = arith.constant 0 : i32
    return %arg0, %c0_i32 : i32, i32
  }
  func.func @transform_1(%arg0: i32) -> (i32, i32) {
    %c0_i32 = arith.constant 0 : i32
    %c0_i32_0 = arith.constant 0 : i32
    %c0_i32_1 = arith.constant 0 : i32
    return %c0_i32, %c0_i32_0 : i32, i32
  }
  func.func @transform_2(%arg0: i32) -> (i32, i32) {
    %c0_i32 = arith.constant 0 : i32
    %c0_i32_0 = arith.constant 0 : i32
    %c0_i32_1 = arith.constant 0 : i32
    return %c0_i32, %c0_i32_0 : i32, i32
  }
  func.func @transform_3(%arg0: i32) -> (i32, i32) {
    %c0_i32 = arith.constant 0 : i32
    %c0_i32_0 = arith.constant 0 : i32
    %c0_i32_1 = arith.constant 0 : i32
    return %c0_i32, %c0_i32_0 : i32, i32
  }
  func.func @transform_4(%arg0: i32) -> (i32, i32) {
    %c0_i32 = arith.constant 0 : i32
    %c0_i32_0 = arith.constant 0 : i32
    %c0_i32_1 = arith.constant 0 : i32
    return %c0_i32, %c0_i32_0 : i32, i32
  }
  func.func @transform_5(%arg0: i32) -> (i32, i32) {
    %c0_i32 = arith.constant 0 : i32
    %c0_i32_0 = arith.constant 0 : i32
    return %arg0, %c0_i32 : i32, i32
  }
}

</mosaic_0001>

<llo_original>
// kernel: tpu_custom_call.1
$region0: #{tpu_custom_call.1}
  #allocation0 [shape = 'u32[]', space=smem, size = 0x4, offset = 0x4, fixed_abs, tag = 'smem constant byte address 0x4 - core index']
  #allocation1 [shape = 'u32[144,128]{1,0:T(1,128)}', space=vmem, size = 0x12000, scoped, tag = 'internal scratch']
  %s0 = inlined_call_operand.hbm [shape: bf16[16,128], index: 0, kind: input, shape index: {}]
  %s1 = inlined_call_operand.hbm [shape: bf16[128,128], index: 1, kind: input, shape index: {}]
  %s2 = inlined_call_operand.vmem [shape: f32[1,128], index: 2, kind: input, shape index: {}]
  %s3 = inlined_call_operand.hbm [shape: bf16[128,128], index: 3, kind: input, shape index: {}]
  %s4 = inlined_call_operand.vmem [shape: f32[1,128], index: 4, kind: input, shape index: {}]
  %s5 = inlined_call_operand.hbm [shape: bf16[16,128], index: 5, kind: output, shape index: {}]
  %s6 = sld [smem:[#allocation0]]
  $region42: #{tpu_custom_call.1} parent=0
    _
  %s8 = ssub.s32 1, %s6
  %s9 = scalar_select 0, %s8, %s6
  $region1: #{tpu_custom_call.1} parent=0
    #allocation2 [shape = 'u8[4096]{0}', space=vmem, size = 0x1000, scoped, tag = 'input window, operand 0, single buffered']
    #allocation3 [shape = 's32[1]{0}', space=sflag, size = 0x4, scoped, tag = 'scoped memory for tpu_custom_call.1']
    #allocation4 [shape = 's32[1]{0}', space=sflag, size = 0x4, scoped, tag = 'scoped memory for tpu_custom_call.1']
    #allocation5 [shape = 'u8[32768]{0}', space=vmem, size = 0x8000, scoped, tag = 'input window, operand 1, single buffered']
    #allocation6 [shape = 's32[1]{0}', space=sflag, size = 0x4, scoped, tag = 'scoped memory for tpu_custom_call.1']
    #allocation7 [shape = 'u8[32768]{0}', space=vmem, size = 0x8000, scoped, tag = 'input window, operand 3, single buffered']
    #allocation8 [shape = 'u8[4096]{0}', space=vmem, size = 0x1000, scoped, tag = 'output window, operand 0, single buffered']
    %10 = vsyncpa [#allocation3], 0
    %11 = vsyncpa [#allocation6], 0
    %12 = vsyncpa [#allocation4], 0
    // Predicated region
    $region2: #{tpu_custom_call.1} parent=1 // pred_check
      _
    $region3: #{tpu_custom_call.1} parent=1 // pred_check_branch
      %14 = sbr.rel (0) target = $region5
    $region4: #{tpu_custom_call.1} parent=1 // pred_region
      %s16 = ssub.s32 128, 128
      %17 = vsyncadd [#allocation3], %s16
      %s18 = sshll.u32 [#allocation2], 4
      %s19 = int_to_ptr.vmem [resolvable:$true] %s18
      %24 = dma.hbm_to_vmem [thread:$0]  %s0, 128, %s19, [#allocation3], 64, 64, 4
    $region5: #{tpu_custom_call.1} parent=1 // pred_fallthru
      _
    // Predicated region
    $region6: #{tpu_custom_call.1} parent=1 // pred_check
      _
    $region7: #{tpu_custom_call.1} parent=1 // pred_check_branch
      %26 = sbr.rel (0) target = $region9
    $region8: #{tpu_custom_call.1} parent=1 // pred_region
      %s28 = ssub.s32 1024, 1024
      %29 = vsyncadd [#allocation6], %s28
      %s30 = sshll.u32 [#allocation5], 4
      %s31 = int_to_ptr.vmem [resolvable:$true] %s30
      %36 = dma.hbm_to_vmem [thread:$0]  %s1, 1024, %s31, [#allocation6], 64, 64, 4
    $region9: #{tpu_custom_call.1} parent=1 // pred_fallthru
      _
    // Predicated region
    $region10: #{tpu_custom_call.1} parent=1 // pred_check
      _
    $region11: #{tpu_custom_call.1} parent=1 // pred_check_branch
      %38 = sbr.rel (0) target = $region13
    $region12: #{tpu_custom_call.1} parent=1 // pred_region
      _
    $region13: #{tpu_custom_call.1} parent=1 // pred_fallthru
      _
    // Predicated region
    $region14: #{tpu_custom_call.1} parent=1 // pred_check
      _
    $region15: #{tpu_custom_call.1} parent=1 // pred_check_branch
      %40 = sbr.rel (0) target = $region17
    $region16: #{tpu_custom_call.1} parent=1 // pred_region
      %s42 = ssub.s32 1024, 1024
      %43 = vsyncadd [#allocation6], %s42
      %s44 = sshll.u32 [#allocation7], 4
      %s45 = int_to_ptr.vmem [resolvable:$true] %s44
      %50 = dma.hbm_to_vmem [thread:$0]  %s3, 1024, %s45, [#allocation6], 64, 64, 4
    $region17: #{tpu_custom_call.1} parent=1 // pred_fallthru
      _
    // Predicated region
    $region18: #{tpu_custom_call.1} parent=1 // pred_check
      _
    $region19: #{tpu_custom_call.1} parent=1 // pred_check_branch
      %52 = sbr.rel (0) target = $region21
    $region20: #{tpu_custom_call.1} parent=1 // pred_region
      _
    $region21: #{tpu_custom_call.1} parent=1 // pred_fallthru
      _
    // Predicated region
    $region22: #{tpu_custom_call.1} parent=1 // pred_check
      _
    $region23: #{tpu_custom_call.1} parent=1 // pred_check_branch
      %54 = sbr.rel (0) target = $region25
    $region24: #{tpu_custom_call.1} parent=1 // pred_region
      %55 = dma.done [#allocation3], 128
    $region25: #{tpu_custom_call.1} parent=1 // pred_fallthru
      _
    // Predicated region
    $region26: #{tpu_custom_call.1} parent=1 // pred_check
      _
    $region27: #{tpu_custom_call.1} parent=1 // pred_check_branch
      %57 = sbr.rel (0) target = $region29
    $region28: #{tpu_custom_call.1} parent=1 // pred_region
      %58 = dma.done [#allocation6], 1024
    $region29: #{tpu_custom_call.1} parent=1 // pred_fallthru
      _
    // Predicated region
    $region30: #{tpu_custom_call.1} parent=1 // pred_check
      _
    $region31: #{tpu_custom_call.1} parent=1 // pred_check_branch
      %60 = sbr.rel (0) target = $region33
    $region32: #{tpu_custom_call.1} parent=1 // pred_region
      %61 = dma.done [#allocation6], 1024
    $region33: #{tpu_custom_call.1} parent=1 // pred_fallthru
      _
    %v63 = vld [vmem:[#allocation2] sm:$0xf]
    %v64 = vld [vmem:[#allocation2 + $0x4] sm:$0xf]
    %v65 = vld [vmem:[#allocation5] sm:$0xf]
    %v66 = vld [vmem:[#allocation5 + $0x4] sm:$0xf]
    %v67 = vld [vmem:[#allocation5 + $0x8] sm:$0xf]
    %v68 = vld [vmem:[#allocation5 + $0xc] sm:$0xf]
    %v69 = vld [vmem:[#allocation5 + $0x10] sm:$0xf]
    %v70 = vld [vmem:[#allocation5 + $0x14] sm:$0xf]
    %v71 = vld [vmem:[#allocation5 + $0x18] sm:$0xf]
    %v72 = vld [vmem:[#allocation5 + $0x1c] sm:$0xf]
    %v73 = vld [vmem:[#allocation5 + $0x20] sm:$0xf]
    %v74 = vld [vmem:[#allocation5 + $0x24] sm:$0xf]
    %v75 = vld [vmem:[#allocation5 + $0x28] sm:$0xf]
    %v76 = vld [vmem:[#allocation5 + $0x2c] sm:$0xf]
    %v77 = vld [vmem:[#allocation5 + $0x30] sm:$0xf]
    %v78 = vld [vmem:[#allocation5 + $0x34] sm:$0xf]
    %v79 = vld [vmem:[#allocation5 + $0x38] sm:$0xf]
    %v80 = vld [vmem:[#allocation5 + $0x3c] sm:$0xf]
    %v81 = vld [vmem:[%s2] sm:$0x1]
    %v83 = vlaneseq
    %v84 = vshrl.u32 %v83, 7
    %v85 = vsub.s32 0, %v84
    %v86 = vrot.slane %v81, %v85
    %v90 = vunpack.c.l.b16 %v63
    %v91 = vunpack.c.l.b16 %v64
    %v92 = vpack.c.b16 %v91, %v90
    %v110 = vunpack.c.l.b16 %v65
    %v111 = vunpack.c.l.b16 %v66
    %v112 = vunpack.c.l.b16 %v67
    %v113 = vunpack.c.l.b16 %v68
    %v114 = vunpack.c.l.b16 %v69
    %v115 = vunpack.c.l.b16 %v70
    %v116 = vunpack.c.l.b16 %v71
    %v117 = vunpack.c.l.b16 %v72
    %v118 = vunpack.c.l.b16 %v73
    %v119 = vunpack.c.l.b16 %v74
    %v120 = vunpack.c.l.b16 %v75
    %v121 = vunpack.c.l.b16 %v76
    %v122 = vunpack.c.l.b16 %v77
    %v123 = vunpack.c.l.b16 %v78
    %v124 = vunpack.c.l.b16 %v79
    %v125 = vunpack.c.l.b16 %v80
    %v126 = vpack.c.b16 %v111, %v110
    %v127 = vpack.c.b16 %v113, %v112
    %v128 = vpack.c.b16 %v115, %v114
    %v129 = vpack.c.b16 %v117, %v116
    %v130 = vpack.c.b16 %v119, %v118
    %v131 = vpack.c.b16 %v121, %v120
    %v132 = vpack.c.b16 %v123, %v122
    %v133 = vpack.c.b16 %v125, %v124
    %142 = vmatprep.subr.bf16.mxu0 0
    %143 = vmatpush1.bf16.msra.mxu0 %v126
    %144 = vmatprep.subr.bf16.mxu0 0
    %145 = vmatpush1.bf16.msra.mxu0 %v127
    %146 = vmatprep.subr.bf16.mxu0 0
    %147 = vmatpush1.bf16.msra.mxu0 %v128
    %148 = vmatprep.subr.bf16.mxu0 0
    %149 = vmatpush1.bf16.msra.mxu0 %v129
    %150 = vmatprep.subr.bf16.mxu0 0
    %151 = vmatpush1.bf16.msra.mxu0 %v130
    %152 = vmatprep.subr.bf16.mxu0 0
    %153 = vmatpush1.bf16.msra.mxu0 %v131
    %154 = vmatprep.subr.bf16.mxu0 0
    %155 = vmatpush1.bf16.msra.mxu0 %v132
    %156 = vmatprep.subr.bf16.mxu0 0
    %157 = vmatpush1.bf16.msra.mxu0 %v133
    %158 = vmatprep.subr.bf16.mxu0 0
    %159 = vmatpush1.bf16.msra.mxu0 0
    %160 = vmatprep.subr.bf16.mxu0 0
    %161 = vmatpush1.bf16.msra.mxu0 0
    %162 = vmatprep.subr.bf16.mxu0 0
    %163 = vmatpush1.bf16.msra.mxu0 0
    %164 = vmatprep.subr.bf16.mxu0 0
    %165 = vmatpush1.bf16.msra.mxu0 0
    %166 = vmatprep.subr.bf16.mxu0 0
    %167 = vmatpush1.bf16.msra.mxu0 0
    %168 = vmatprep.subr.bf16.mxu0 0
    %169 = vmatpush1.bf16.msra.mxu0 0
    %170 = vmatprep.subr.bf16.mxu0 0
    %171 = vmatpush1.bf16.msra.mxu0 0
    %172 = vmatprep.subr.bf16.mxu0 0
    %173 = vmatpush1.bf16.msra.mxu0 0
    %174 = vmatprep.mubr.bf16.mxu0 0
    %175 = vmatmul.mubr.bf16.gmra.mrb[0].mxu0 %v92
    %v176 = vpop.f32.mrb[0].mxu0
    %v177 = vadd.f32 %v86, %v176
    %v178 = vpop.f32.mrb[0].mxu0
    %v179 = vpop.f32.mrb[0].mxu0
    %v180 = vadd.f32 %v86, %v179
    %v181 = vpop.f32.mrb[0].mxu0
    %182 = vdwg.mxu0
    %v183 = vmax.f32 %v177, 0.0
    %v184 = vmax.f32 %v180, 0.0
    %v185 = vpack.c.bf16 %v184, %v183
    %v186 = vld [vmem:[#allocation7] sm:$0xf]
    %v187 = vld [vmem:[#allocation7 + $0x4] sm:$0xf]
    %v188 = vld [vmem:[#allocation7 + $0x8] sm:$0xf]
    %v189 = vld [vmem:[#allocation7 + $0xc] sm:$0xf]
    %v190 = vld [vmem:[#allocation7 + $0x10] sm:$0xf]
    %v191 = vld [vmem:[#allocation7 + $0x14] sm:$0xf]
    %v192 = vld [vmem:[#allocation7 + $0x18] sm:$0xf]
    %v193 = vld [vmem:[#allocation7 + $0x1c] sm:$0xf]
    %v194 = vld [vmem:[#allocation7 + $0x20] sm:$0xf]
    %v195 = vld [vmem:[#allocation7 + $0x24] sm:$0xf]
    %v196 = vld [vmem:[#allocation7 + $0x28] sm:$0xf]
    %v197 = vld [vmem:[#allocation7 + $0x2c] sm:$0xf]
    %v198 = vld [vmem:[#allocation7 + $0x30] sm:$0xf]
    %v199 = vld [vmem:[#allocation7 + $0x34] sm:$0xf]
    %v200 = vld [vmem:[#allocation7 + $0x38] sm:$0xf]
    %v201 = vld [vmem:[#allocation7 + $0x3c] sm:$0xf]
    %v202 = vld [vmem:[%s4] sm:$0x1]
    %v204 = vlaneseq
    %v205 = vshrl.u32 %v204, 7
    %v206 = vsub.s32 0, %v205
    %v207 = vrot.slane %v202, %v206
    %v225 = vunpack.c.l.b16 %v186
    %v226 = vunpack.c.l.b16 %v187
    %v227 = vunpack.c.l.b16 %v188
    %v228 = vunpack.c.l.b16 %v189
    %v229 = vunpack.c.l.b16 %v190
    %v230 = vunpack.c.l.b16 %v191
    %v231 = vunpack.c.l.b16 %v192
    %v232 = vunpack.c.l.b16 %v193
    %v233 = vunpack.c.l.b16 %v194
    %v234 = vunpack.c.l.b16 %v195
    %v235 = vunpack.c.l.b16 %v196
    %v236 = vunpack.c.l.b16 %v197
    %v237 = vunpack.c.l.b16 %v198
    %v238 = vunpack.c.l.b16 %v199
    %v239 = vunpack.c.l.b16 %v200
    %v240 = vunpack.c.l.b16 %v201
    %v241 = vpack.c.b16 %v226, %v225
    %v242 = vpack.c.b16 %v228, %v227
    %v243 = vpack.c.b16 %v230, %v229
    %v244 = vpack.c.b16 %v232, %v231
    %v245 = vpack.c.b16 %v234, %v233
    %v246 = vpack.c.b16 %v236, %v235
    %v247 = vpack.c.b16 %v238, %v237
    %v248 = vpack.c.b16 %v240, %v239
    %257 = vmatprep.subr.bf16.mxu0 0
    %258 = vmatpush1.bf16.msra.mxu0 %v241
    %259 = vmatprep.subr.bf16.mxu0 0
    %260 = vmatpush1.bf16.msra.mxu0 %v242
    %261 = vmatprep.subr.bf16.mxu0 0
    %262 = vmatpush1.bf16.msra.mxu0 %v243
    %263 = vmatprep.subr.bf16.mxu0 0
    %264 = vmatpush1.bf16.msra.mxu0 %v244
    %265 = vmatprep.subr.bf16.mxu0 0
    %266 = vmatpush1.bf16.msra.mxu0 %v245
    %267 = vmatprep.subr.bf16.mxu0 0
    %268 = vmatpush1.bf16.msra.mxu0 %v246
    %269 = vmatprep.subr.bf16.mxu0 0
    %270 = vmatpush1.bf16.msra.mxu0 %v247
    %271 = vmatprep.subr.bf16.mxu0 0
    %272 = vmatpush1.bf16.msra.mxu0 %v248
    %273 = vmatprep.subr.bf16.mxu0 0
    %274 = vmatpush1.bf16.msra.mxu0 0
    %275 = vmatprep.subr.bf16.mxu0 0
    %276 = vmatpush1.bf16.msra.mxu0 0
    %277 = vmatprep.subr.bf16.mxu0 0
    %278 = vmatpush1.bf16.msra.mxu0 0
    %279 = vmatprep.subr.bf16.mxu0 0
    %280 = vmatpush1.bf16.msra.mxu0 0
    %281 = vmatprep.subr.bf16.mxu0 0
    %282 = vmatpush1.bf16.msra.mxu0 0
    %283 = vmatprep.subr.bf16.mxu0 0
    %284 = vmatpush1.bf16.msra.mxu0 0
    %285 = vmatprep.subr.bf16.mxu0 0
    %286 = vmatpush1.bf16.msra.mxu0 0
    %287 = vmatprep.subr.bf16.mxu0 0
    %288 = vmatpush1.bf16.msra.mxu0 0
    %289 = vmatprep.mubr.bf16.mxu0 0
    %290 = vmatmul.mubr.bf16.gmra.mrb[0].mxu0 %v185
    %v291 = vpop.f32.mrb[0].mxu0
    %v292 = vadd.f32 %v207, %v291
    %v293 = vpop.f32.mrb[0].mxu0
    %v294 = vpop.f32.mrb[0].mxu0
    %v295 = vadd.f32 %v207, %v294
    %v296 = vpop.f32.mrb[0].mxu0
    %297 = vdwg.mxu0
    %v298 = vpack.c.bf16 %v295, %v292
    %v300 = vunpack.c.l.b16 %v298
    %v301 = vunpack.c.h.b16 %v298
    %v302 = vpack.c.b16 %v300, %v300
    %v303 = vpack.c.b16 %v301, %v301
    %306 = vst [vmem:[#allocation8] sm:$0xf] %v302
    %307 = vst [vmem:[#allocation8 + $0x4] sm:$0xf] %v303
    // Predicated region
    $region34: #{tpu_custom_call.1} parent=1 // pred_check
      _
    $region35: #{tpu_custom_call.1} parent=1 // pred_check_branch
      %309 = sbr.rel (0) target = $region37
    $region36: #{tpu_custom_call.1} parent=1 // pred_region
      %s311 = ssub.s32 128, 128
      %312 = vsyncadd [#allocation4], %s311
      %s313 = sshll.u32 [#allocation8], 4
      %s314 = int_to_ptr.vmem [resolvable:$true] %s313
      %319 = dma.vmem_to_hbm [thread:$0]  %s314, 128, %s5, [#allocation4], 64, 64, 4
    $region37: #{tpu_custom_call.1} parent=1 // pred_fallthru
      _
    // Predicated region
    $region38: #{tpu_custom_call.1} parent=1 // pred_check
      _
    $region39: #{tpu_custom_call.1} parent=1 // pred_check_branch
      %321 = sbr.rel (0) target = $region41
    $region40: #{tpu_custom_call.1} parent=1 // pred_region
      %322 = dma.done [#allocation4], 128
    $region41: #{tpu_custom_call.1} parent=1 // pred_fallthru
      _
    %323 = vsyncpa [#allocation3], 1
    %324 = vsyncpa [#allocation6], 1
    %325 = vsyncpa [#allocation4], 1

// kernel: tpu_custom_call.1
$region0: #{tpu_custom_call.1}
  #allocation0 [shape = 'u32[]', space=smem, size = 0x4, offset = 0x4, fixed_abs, tag = 'smem constant byte address 0x4 - core index']
  #allocation1 [shape = 'u32[144,128]{1,0:T(1,128)}', space=vmem, size = 0x12000, scoped, tag = 'internal scratch']
  %s0 = inlined_call_operand.hbm [shape: bf16[16,128], index: 0, kind: input, shape index: {}]
  %s1 = inlined_call_operand.hbm [shape: bf16[128,128], index: 1, kind: input, shape index: {}]
  %s2 = inlined_call_operand.vmem [shape: f32[1,128], index: 2, kind: input, shape index: {}]
  %s3 = inlined_call_operand.hbm [shape: bf16[128,128], index: 3, kind: input, shape index: {}]
  %s4 = inlined_call_operand.vmem [shape: f32[1,128], index: 4, kind: input, shape index: {}]
  %s5 = inlined_call_operand.hbm [shape: bf16[16,128], index: 5, kind: output, shape index: {}]
  %s6 = sld [smem:[#allocation0]]
  $region42: #{tpu_custom_call.1} parent=0
    _
  %s8 = ssub.s32 1, %s6
  %s9 = scalar_select 0, %s8, %s6
  $region1: #{tpu_custom_call.1} parent=0
    #allocation2 [shape = 'u8[4096]{0}', space=vmem, size = 0x1000, scoped, tag = 'input window, operand 0, single buffered']
    #allocation3 [shape = 's32[1]{0}', space=sflag, size = 0x4, scoped, tag = 'scoped memory for tpu_custom_call.1']
    #allocation4 [shape = 's32[1]{0}', space=sflag, size = 0x4, scoped, tag = 'scoped memory for tpu_custom_call.1']
    #allocation5 [shape = 'u8[32768]{0}', space=vmem, size = 0x8000, scoped, tag = 'input window, operand 1, single buffered']
    #allocation6 [shape = 's32[1]{0}', space=sflag, size = 0x4, scoped, tag = 'scoped memory for tpu_custom_call.1']
    #allocation7 [shape = 'u8[32768]{0}', space=vmem, size = 0x8000, scoped, tag = 'input window, operand 3, single buffered']
    #allocation8 [shape = 'u8[4096]{0}', space=vmem, size = 0x1000, scoped, tag = 'output window, operand 0, single buffered']
    %10 = vsyncpa [#allocation3], 0
    %11 = vsyncpa [#allocation6], 0
    %12 = vsyncpa [#allocation4], 0
    // Predicated region
    $region2: #{tpu_custom_call.1} parent=1 // pred_check
      _
    $region3: #{tpu_custom_call.1} parent=1 // pred_check_branch
      %14 = sbr.rel (0) target = $region5
    $region4: #{tpu_custom_call.1} parent=1 // pred_region
      %s16 = ssub.s32 128, 128
      %17 = vsyncadd [#allocation3], %s16
      %s18 = sshll.u32 [#allocation2], 4
      %s19 = int_to_ptr.vmem [resolvable:$true] %s18
      %24 = dma.hbm_to_vmem [thread:$0]  %s0, 128, %s19, [#allocation3], 64, 64, 4
    $region5: #{tpu_custom_call.1} parent=1 // pred_fallthru
      _
    // Predicated region
    $region6: #{tpu_custom_call.1} parent=1 // pred_check
      _
    $region7: #{tpu_custom_call.1} parent=1 // pred_check_branch
      %26 = sbr.rel (0) target = $region9
    $region8: #{tpu_custom_call.1} parent=1 // pred_region
      %s28 = ssub.s32 1024, 1024
      %29 = vsyncadd [#allocation6], %s28
      %s30 = sshll.u32 [#allocation5], 4
      %s31 = int_to_ptr.vmem [resolvable:$true] %s30
      %36 = dma.hbm_to_vmem [thread:$0]  %s1, 1024, %s31, [#allocation6], 64, 64, 4
    $region9: #{tpu_custom_call.1} parent=1 // pred_fallthru
      _
    // Predicated region
    $region10: #{tpu_custom_call.1} parent=1 // pred_check
      _
    $region11: #{tpu_custom_call.1} parent=1 // pred_check_branch
      %38 = sbr.rel (0) target = $region13
    $region12: #{tpu_custom_call.1} parent=1 // pred_region
      _
    $region13: #{tpu_custom_call.1} parent=1 // pred_fallthru
      _
    // Predicated region
    $region14: #{tpu_custom_call.1} parent=1 // pred_check
      _
    $region15: #{tpu_custom_call.1} parent=1 // pred_check_branch
      %40 = sbr.rel (0) target = $region17
    $region16: #{tpu_custom_call.1} parent=1 // pred_region
      %s42 = ssub.s32 1024, 1024
      %43 = vsyncadd [#allocation6], %s42
      %s44 = sshll.u32 [#allocation7], 4
      %s45 = int_to_ptr.vmem [resolvable:$true] %s44
      %50 = dma.hbm_to_vmem [thread:$0]  %s3, 1024, %s45, [#allocation6], 64, 64, 4
    $region17: #{tpu_custom_call.1} parent=1 // pred_fallthru
      _
    // Predicated region
    $region18: #{tpu_custom_call.1} parent=1 // pred_check
      _
    $region19: #{tpu_custom_call.1} parent=1 // pred_check_branch
      %52 = sbr.rel (0) target = $region21
    $region20: #{tpu_custom_call.1} parent=1 // pred_region
      _
    $region21: #{tpu_custom_call.1} parent=1 // pred_fallthru
      _
    // Predicated region
    $region22: #{tpu_custom_call.1} parent=1 // pred_check
      _
    $region23: #{tpu_custom_call.1} parent=1 // pred_check_branch
      %54 = sbr.rel (0) target = $region25
    $region24: #{tpu_custom_call.1} parent=1 // pred_region
      %55 = dma.done [#allocation3], 128
    $region25: #{tpu_custom_call.1} parent=1 // pred_fallthru
      _
    // Predicated region
    $region26: #{tpu_custom_call.1} parent=1 // pred_check
      _
    $region27: #{tpu_custom_call.1} parent=1 // pred_check_branch
      %57 = sbr.rel (0) target = $region29
    $region28: #{tpu_custom_call.1} parent=1 // pred_region
      %58 = dma.done [#allocation6], 1024
    $region29: #{tpu_custom_call.1} parent=1 // pred_fallthru
      _
    // Predicated region
    $region30: #{tpu_custom_call.1} parent=1 // pred_check
      _
    $region31: #{tpu_custom_call.1} parent=1 // pred_check_branch
      %60 = sbr.rel (0) target = $region33
    $region32: #{tpu_custom_call.1} parent=1 // pred_region
      %61 = dma.done [#allocation6], 1024
    $region33: #{tpu_custom_call.1} parent=1 // pred_fallthru
      _
    %v63 = vld [vmem:[#allocation2] sm:$0xf]
    %v64 = vld [vmem:[#allocation2 + $0x4] sm:$0xf]
    %v65 = vld [vmem:[#allocation5] sm:$0xf]
    %v66 = vld [vmem:[#allocation5 + $0x4] sm:$0xf]
    %v67 = vld [vmem:[#allocation5 + $0x8] sm:$0xf]
    %v68 = vld [vmem:[#allocation5 + $0xc] sm:$0xf]
    %v69 = vld [vmem:[#allocation5 + $0x10] sm:$0xf]
    %v70 = vld [vmem:[#allocation5 + $0x14] sm:$0xf]
    %v71 = vld [vmem:[#allocation5 + $0x18] sm:$0xf]
    %v72 = vld [vmem:[#allocation5 + $0x1c] sm:$0xf]
    %v73 = vld [vmem:[#allocation5 + $0x20] sm:$0xf]
    %v74 = vld [vmem:[#allocation5 + $0x24] sm:$0xf]
    %v75 = vld [vmem:[#allocation5 + $0x28] sm:$0xf]
    %v76 = vld [vmem:[#allocation5 + $0x2c] sm:$0xf]
    %v77 = vld [vmem:[#allocation5 + $0x30] sm:$0xf]
    %v78 = vld [vmem:[#allocation5 + $0x34] sm:$0xf]
    %v79 = vld [vmem:[#allocation5 + $0x38] sm:$0xf]
    %v80 = vld [vmem:[#allocation5 + $0x3c] sm:$0xf]
    %v81 = vld [vmem:[%s2] sm:$0x1]
    %v83 = vlaneseq
    %v84 = vshrl.u32 %v83, 7
    %v85 = vsub.s32 0, %v84
    %v86 = vrot.slane %v81, %v85
    %v90 = vunpack.c.l.b16 %v63
    %v91 = vunpack.c.l.b16 %v64
    %v92 = vpack.c.b16 %v91, %v90
    %v110 = vunpack.c.l.b16 %v65
    %v111 = vunpack.c.l.b16 %v66
    %v112 = vunpack.c.l.b16 %v67
    %v113 = vunpack.c.l.b16 %v68
    %v114 = vunpack.c.l.b16 %v69
    %v115 = vunpack.c.l.b16 %v70
    %v116 = vunpack.c.l.b16 %v71
    %v117 = vunpack.c.l.b16 %v72
    %v118 = vunpack.c.l.b16 %v73
    %v119 = vunpack.c.l.b16 %v74
    %v120 = vunpack.c.l.b16 %v75
    %v121 = vunpack.c.l.b16 %v76
    %v122 = vunpack.c.l.b16 %v77
    %v123 = vunpack.c.l.b16 %v78
    %v124 = vunpack.c.l.b16 %v79
    %v125 = vunpack.c.l.b16 %v80
    %v126 = vpack.c.b16 %v111, %v110
    %v127 = vpack.c.b16 %v113, %v112
    %v128 = vpack.c.b16 %v115, %v114
    %v129 = vpack.c.b16 %v117, %v116
    %v130 = vpack.c.b16 %v119, %v118
    %v131 = vpack.c.b16 %v121, %v120
    %v132 = vpack.c.b16 %v123, %v122
    %v133 = vpack.c.b16 %v125, %v124
    %142 = vmatprep.subr.bf16.mxu0 0
    %143 = vmatpush1.bf16.msra.mxu0 %v126
    %144 = vmatprep.subr.bf16.mxu0 0
    %145 = vmatpush1.bf16.msra.mxu0 %v127
    %146 = vmatprep.subr.bf16.mxu0 0
    %147 = vmatpush1.bf16.msra.mxu0 %v128
    %148 = vmatprep.subr.bf16.mxu0 0
    %149 = vmatpush1.bf16.msra.mxu0 %v129
    %150 = vmatprep.subr.bf16.mxu0 0
    %151 = vmatpush1.bf16.msra.mxu0 %v130
    %152 = vmatprep.subr.bf16.mxu0 0
    %153 = vmatpush1.bf16.msra.mxu0 %v131
    %154 = vmatprep.subr.bf16.mxu0 0
    %155 = vmatpush1.bf16.msra.mxu0 %v132
    %156 = vmatprep.subr.bf16.mxu0 0
    %157 = vmatpush1.bf16.msra.mxu0 %v133
    %158 = vmatprep.subr.bf16.mxu0 0
    %159 = vmatpush1.bf16.msra.mxu0 0
    %160 = vmatprep.subr.bf16.mxu0 0
    %161 = vmatpush1.bf16.msra.mxu0 0
    %162 = vmatprep.subr.bf16.mxu0 0
    %163 = vmatpush1.bf16.msra.mxu0 0
    %164 = vmatprep.subr.bf16.mxu0 0
    %165 = vmatpush1.bf16.msra.mxu0 0
    %166 = vmatprep.subr.bf16.mxu0 0
    %167 = vmatpush1.bf16.msra.mxu0 0
    %168 = vmatprep.subr.bf16.mxu0 0
    %169 = vmatpush1.bf16.msra.mxu0 0
    %170 = vmatprep.subr.bf16.mxu0 0
    %171 = vmatpush1.bf16.msra.mxu0 0
    %172 = vmatprep.subr.bf16.mxu0 0
    %173 = vmatpush1.bf16.msra.mxu0 0
    %174 = vmatprep.mubr.bf16.mxu0 0
    %175 = vmatmul.mubr.bf16.gmra.mrb[0].mxu0 %v92
    %v176 = vpop.f32.mrb[0].mxu0
    %v177 = vadd.f32 %v86, %v176
    %v178 = vpop.f32.mrb[0].mxu0
    %v179 = vpop.f32.mrb[0].mxu0
    %v180 = vadd.f32 %v86, %v179
    %v181 = vpop.f32.mrb[0].mxu0
    %182 = vdwg.mxu0
    %v183 = vmax.f32 %v177, 0.0
    %v184 = vmax.f32 %v180, 0.0
    %v185 = vpack.c.bf16 %v184, %v183
    %v186 = vld [vmem:[#allocation7] sm:$0xf]
    %v187 = vld [vmem:[#allocation7 + $0x4] sm:$0xf]
    %v188 = vld [vmem:[#allocation7 + $0x8] sm:$0xf]
    %v189 = vld [vmem:[#allocation7 + $0xc] sm:$0xf]
    %v190 = vld [vmem:[#allocation7 + $0x10] sm:$0xf]
    %v191 = vld [vmem:[#allocation7 + $0x14] sm:$0xf]
    %v192 = vld [vmem:[#allocation7 + $0x18] sm:$0xf]
    %v193 = vld [vmem:[#allocation7 + $0x1c] sm:$0xf]
    %v194 = vld [vmem:[#allocation7 + $0x20] sm:$0xf]
    %v195 = vld [vmem:[#allocation7 + $0x24] sm:$0xf]
    %v196 = vld [vmem:[#allocation7 + $0x28] sm:$0xf]
    %v197 = vld [vmem:[#allocation7 + $0x2c] sm:$0xf]
    %v198 = vld [vmem:[#allocation7 + $0x30] sm:$0xf]
    %v199 = vld [vmem:[#allocation7 + $0x34] sm:$0xf]
    %v200 = vld [vmem:[#allocation7 + $0x38] sm:$0xf]
    %v201 = vld [vmem:[#allocation7 + $0x3c] sm:$0xf]
    %v202 = vld [vmem:[%s4] sm:$0x1]
    %v204 = vlaneseq
    %v205 = vshrl.u32 %v204, 7
    %v206 = vsub.s32 0, %v205
    %v207 = vrot.slane %v202, %v206
    %v225 = vunpack.c.l.b16 %v186
    %v226 = vunpack.c.l.b16 %v187
    %v227 = vunpack.c.l.b16 %v188
    %v228 = vunpack.c.l.b16 %v189
    %v229 = vunpack.c.l.b16 %v190
    %v230 = vunpack.c.l.b16 %v191
    %v231 = vunpack.c.l.b16 %v192
    %v232 = vunpack.c.l.b16 %v193
    %v233 = vunpack.c.l.b16 %v194
    %v234 = vunpack.c.l.b16 %v195
    %v235 = vunpack.c.l.b16 %v196
    %v236 = vunpack.c.l.b16 %v197
    %v237 = vunpack.c.l.b16 %v198
    %v238 = vunpack.c.l.b16 %v199
    %v239 = vunpack.c.l.b16 %v200
    %v240 = vunpack.c.l.b16 %v201
    %v241 = vpack.c.b16 %v226, %v225
    %v242 = vpack.c.b16 %v228, %v227
    %v243 = vpack.c.b16 %v230, %v229
    %v244 = vpack.c.b16 %v232, %v231
    %v245 = vpack.c.b16 %v234, %v233
    %v246 = vpack.c.b16 %v236, %v235
    %v247 = vpack.c.b16 %v238, %v237
    %v248 = vpack.c.b16 %v240, %v239
    %257 = vmatprep.subr.bf16.mxu0 0
    %258 = vmatpush1.bf16.msra.mxu0 %v241
    %259 = vmatprep.subr.bf16.mxu0 0
    %260 = vmatpush1.bf16.msra.mxu0 %v242
    %261 = vmatprep.subr.bf16.mxu0 0
    %262 = vmatpush1.bf16.msra.mxu0 %v243
    %263 = vmatprep.subr.bf16.mxu0 0
    %264 = vmatpush1.bf16.msra.mxu0 %v244
    %265 = vmatprep.subr.bf16.mxu0 0
    %266 = vmatpush1.bf16.msra.mxu0 %v245
    %267 = vmatprep.subr.bf16.mxu0 0
    %268 = vmatpush1.bf16.msra.mxu0 %v246
    %269 = vmatprep.subr.bf16.mxu0 0
    %270 = vmatpush1.bf16.msra.mxu0 %v247
    %271 = vmatprep.subr.bf16.mxu0 0
    %272 = vmatpush1.bf16.msra.mxu0 %v248
    %273 = vmatprep.subr.bf16.mxu0 0
    %274 = vmatpush1.bf16.msra.mxu0 0
    %275 = vmatprep.subr.bf16.mxu0 0
    %276 = vmatpush1.bf16.msra.mxu0 0
    %277 = vmatprep.subr.bf16.mxu0 0
    %278 = vmatpush1.bf16.msra.mxu0 0
    %279 = vmatprep.subr.bf16.mxu0 0
    %280 = vmatpush1.bf16.msra.mxu0 0
    %281 = vmatprep.subr.bf16.mxu0 0
    %282 = vmatpush1.bf16.msra.mxu0 0
    %283 = vmatprep.subr.bf16.mxu0 0
    %284 = vmatpush1.bf16.msra.mxu0 0
    %285 = vmatprep.subr.bf16.mxu0 0
    %286 = vmatpush1.bf16.msra.mxu0 0
    %287 = vmatprep.subr.bf16.mxu0 0
    %288 = vmatpush1.bf16.msra.mxu0 0
    %289 = vmatprep.mubr.bf16.mxu0 0
    %290 = vmatmul.mubr.bf16.gmra.mrb[0].mxu0 %v185
    %v291 = vpop.f32.mrb[0].mxu0
    %v292 = vadd.f32 %v207, %v291
    %v293 = vpop.f32.mrb[0].mxu0
    %v294 = vpop.f32.mrb[0].mxu0
    %v295 = vadd.f32 %v207, %v294
    %v296 = vpop.f32.mrb[0].mxu0
    %297 = vdwg.mxu0
    %v298 = vpack.c.bf16 %v295, %v292
    %v300 = vunpack.c.l.b16 %v298
    %v301 = vunpack.c.h.b16 %v298
    %v302 = vpack.c.b16 %v300, %v300
    %v303 = vpack.c.b16 %v301, %v301
    %306 = vst [vmem:[#allocation8] sm:$0xf] %v302
    %307 = vst [vmem:[#allocation8 + $0x4] sm:$0xf] %v303
    // Predicated region
    $region34: #{tpu_custom_call.1} parent=1 // pred_check
      _
    $region35: #{tpu_custom_call.1} parent=1 // pred_check_branch
      %309 = sbr.rel (0) target = $region37
    $region36: #{tpu_custom_call.1} parent=1 // pred_region
      %s311 = ssub.s32 128, 128
      %312 = vsyncadd [#allocation4], %s311
      %s313 = sshll.u32 [#allocation8], 4
      %s314 = int_to_ptr.vmem [resolvable:$true] %s313
      %319 = dma.vmem_to_hbm [thread:$0]  %s314, 128, %s5, [#allocation4], 64, 64, 4
    $region37: #{tpu_custom_call.1} parent=1 // pred_fallthru
      _
    // Predicated region
    $region38: #{tpu_custom_call.1} parent=1 // pred_check
      _
    $region39: #{tpu_custom_call.1} parent=1 // pred_check_branch
      %321 = sbr.rel (0) target = $region41
    $region40: #{tpu_custom_call.1} parent=1 // pred_region
      %322 = dma.done [#allocation4], 128
    $region41: #{tpu_custom_call.1} parent=1 // pred_fallthru
      _
    %323 = vsyncpa [#allocation3], 1
    %324 = vsyncpa [#allocation6], 1
    %325 = vsyncpa [#allocation4], 1

</llo_original>
